<compile_context>
chip_gen: v6e
topology: v6e:2x2x1
jax: 0.10.0
libtpu: 0.0.40
codegen_flags: <defaults>
</compile_context>

<pallas_src>
import numpy as np
import jax
import jax.numpy as jnp
from jax import lax
from jax.experimental import pallas as pl
from jax.experimental.pallas import tpu as pltpu


# ----------------------------------------------------------------------------
# Fused ReLU -> 1x1 Conv -> BN -> 3x3 pool kernel (per batch image).
# ----------------------------------------------------------------------------
def _make_fused_kernel(W, stride, mode, has_pre):
    NEG = float("-inf")

    def kernel(*refs):
        i = 0
        x_ref = refs[i]; i += 1
        if has_pre:
            w_ref, scale_ref, bias_ref = refs[i], refs[i + 1], refs[i + 2]
            i += 3
        edge_ref = refs[i]; i += 1
        if stride > 1:
            sel_ref = refs[i]; i += 1
        elif mode == "avg":
            invc_ref = refs[i]; i += 1
        o_ref = refs[i]

        # (C, H*W) tile, cast on load (hidden under the DMA/compute overlap).
        x = x_ref[0].astype(jnp.float32)

        if has_pre:
            x = jnp.maximum(x, 0.0)                                  # ReLU
            x = jnp.dot(w_ref[...], x,                               # 1x1 conv
                        preferred_element_type=jnp.float32)
            x = x * scale_ref[...] + bias_ref[...]                   # folded BN

        # Edge-validity masks, shape (1, H*W), resident across the grid.
        lm = edge_ref[0:1, :]   # has left  neighbor (w > 0)
        rm = edge_ref[1:2, :]   # has right neighbor (w < W-1)
        um = edge_ref[2:3, :]   # has upper neighbor (h > 0)
        dm = edge_ref[3:4, :]   # has lower neighbor (h < H-1)

        if mode == "avg":
            # Zero-padded separable 3x3 sum (count applied later).
            row = (x
                   + jnp.roll(x, 1, axis=1) * lm
                   + jnp.roll(x, -1, axis=1) * rm)
            pooled = (row
                      + jnp.roll(row, W, axis=1) * um
                      + jnp.roll(row, -W, axis=1) * dm)
        else:
            # -inf padded separable 3x3 max.
            row = jnp.maximum(
                x,
                jnp.maximum(jnp.where(lm > 0, jnp.roll(x, 1, axis=1), NEG),
                            jnp.where(rm > 0, jnp.roll(x, -1, axis=1), NEG)))
            pooled = jnp.maximum(
                row,
                jnp.maximum(jnp.where(um > 0, jnp.roll(row, W, axis=1), NEG),
                            jnp.where(dm > 0, jnp.roll(row, -W, axis=1), NEG)))

        if stride > 1:
            # One-hot strided selection (avg reciprocal counts folded in);
            # only (C, H_out*W_out) is written back to HBM.
            pooled = jnp.dot(pooled, sel_ref[...],
                             preferred_element_type=jnp.float32)
        elif mode == "avg":
            pooled = pooled * invc_ref[...]   # count_include_pad=False

        o_ref[0] = pooled.astype(o_ref.dtype)

    return kernel


def pooling_forward(x, stride, mode, pre_params=None, eps=1e-5):
    N, C_in, H, W = x.shape
    HW = H * W
    H_out = (H + 2 - 3) // stride + 1
    W_out = (W + 2 - 3) // stride + 1
    HWo = H_out * W_out
    has_pre = pre_params is not None
    C_out = pre_params[0].shape[0] if has_pre else C_in

    inputs = [x.reshape(N, C_in, HW)]           # free reshape in NCHW
    in_specs = [pl.BlockSpec((1, C_in, HW), lambda n: (n, 0, 0))]

    if has_pre:
        w, gamma, beta, rmean, rvar = pre_params
        wm = w.reshape(C_out, C_in).astype(jnp.float32)
        scale = (gamma / jnp.sqrt(rvar + eps)).astype(jnp.float32)
        bias = (beta - rmean * scale).astype(jnp.float32)
        inputs += [wm, scale.reshape(C_out, 1), bias.reshape(C_out, 1)]
        in_specs += [pl.BlockSpec((C_out, C_in), lambda n: (0, 0)),
                     pl.BlockSpec((C_out, 1), lambda n: (0, 0)),
                     pl.BlockSpec((C_out, 1), lambda n: (0, 0))]

    # Edge masks (built once at trace time; constant block index -> fetched
    # into VMEM once, not per grid step).
    wi = np.arange(HW) % W
    hi = np.arange(HW) // W
    edge = np.stack([(wi > 0), (wi < W - 1), (hi > 0), (hi < H - 1)],
                    axis=0).astype(np.float32)
    inputs.append(jnp.asarray(edge))
    in_specs.append(pl.BlockSpec((4, HW), lambda n: (0, 0)))

    if stride > 1:
        ho = np.arange(H_out) * stride
        wo = np.arange(W_out) * stride
        flat = (ho[:, None] * W + wo[None, :]).reshape(-1)
        sel = np.zeros((HW, HWo), np.float32)
        sel[flat, np.arange(HWo)] = 1.0
        if mode == "avg":
            rc = 3.0 - (ho == 0) - (ho == H - 1)
            cc = 3.0 - (wo == 0) - (wo == W - 1)
            inv = (1.0 / (rc[:, None] * cc[None, :])).astype(np.float32)
            sel = sel * inv.reshape(1, HWo)
        inputs.append(jnp.asarray(sel))
        in_specs.append(pl.BlockSpec((HW, HWo), lambda n: (0, 0)))
    elif mode == "avg":
        rc = 3.0 - (hi == 0) - (hi == H - 1)
        cc = 3.0 - (wi == 0) - (wi == W - 1)
        invc = (1.0 / (rc * cc)).astype(np.float32).reshape(1, HW)
        inputs.append(jnp.asarray(invc))
        in_specs.append(pl.BlockSpec((1, HW), lambda n: (0, 0)))

    out = pl.pallas_call(
        _make_fused_kernel(W, stride, mode, has_pre),
        out_shape=jax.ShapeDtypeStruct((N, C_out, HWo), x.dtype),
        grid=(N,),
        in_specs=in_specs,
        out_specs=pl.BlockSpec((1, C_out, HWo), lambda n: (n, 0, 0)),
        compiler_params=pltpu.CompilerParams(
            dimension_semantics=("parallel",)),
    )(*inputs)

    return out.reshape(N, C_out, H_out, W_out)


# ----------------------------------------------------------------------------
# POOLING module equivalent
# ----------------------------------------------------------------------------
class PoolingPallas:
    def __init__(self, C_in, C_out, stride, mode, key):
        if mode not in ("avg", "max"):
            raise ValueError("Invalid mode={:} in POOLING".format(mode))
        self.stride = stride
        self.mode = mode
        if C_in == C_out:
            self.params = None
        else:
            kw, kg, kb = jax.random.split(key, 3)
            w = jax.random.normal(kw, (C_out, C_in, 1, 1), jnp.float32) / jnp.sqrt(C_in)
            gamma = 1.0 + 0.1 * jax.random.normal(kg, (C_out,), jnp.float32)
            beta = 0.1 * jax.random.normal(kb, (C_out,), jnp.float32)
            running_mean = jnp.zeros((C_out,), jnp.float32)
            running_var = jnp.ones((C_out,), jnp.float32)
            self.params = (w, gamma, beta, running_mean, running_var)

    def __call__(self, x):
        return pooling_forward(x, self.stride, self.mode, self.params)


# ----------------------------------------------------------------------------
# Pure-JAX references (for correctness checking only)
# ----------------------------------------------------------------------------
def ref_preprocess(x, w, gamma, beta, rm, rv, eps=1e-5):
    xr = jnp.maximum(x, 0.0)
    y = jnp.einsum("nchw,oc->nohw", xr, w.reshape(w.shape[0], w.shape[1]))
    scale = gamma / jnp.sqrt(rv + eps)
    bias = beta - rm * scale
    return y * scale[None, :, None, None] + bias[None, :, None, None]


def ref_pool(x, stride, mode):
    dims = (1, 1, 3, 3)
    strides = (1, 1, stride, stride)
    pad = ((0, 0), (0, 0), (1, 1), (1, 1))
    if mode == "max":
        return lax.reduce_window(x, -jnp.inf, lax.max, dims, strides, pad)
    s = lax.reduce_window(x, 0.0, lax.add, dims, strides, pad)
    c = lax.reduce_window(jnp.ones_like(x), 0.0, lax.add, dims, strides, pad)
    return s / c


if __name__ == "__main__":
    key = jax.random.PRNGKey(0)
    kx, kmod = jax.random.split(key)

    x = jax.random.normal(kx, (2, 4, 16, 16), jnp.float32)

    # Case 1: C_in != C_out -> ReLU-Conv1x1-BN preprocess, avg pool, stride 2.
    mod1 = PoolingPallas(C_in=4, C_out=8, stride=2, mode="avg", key=kmod)
    out1 = jax.block_until_ready(mod1(x))
    ref1 = ref_pool(ref_preprocess(x, *mod1.params), 2, "avg")
    assert out1.shape == (2, 8, 8, 8), out1.shape
    assert jnp.allclose(out1, ref1, atol=1e-4, rtol=1e-4), float(jnp.max(jnp.abs(out1 - ref1)))

    # Case 2: C_in == C_out -> identity preprocess, max pool, stride 1.
    mod2 = PoolingPallas(C_in=4, C_out=4, stride=1, mode="max", key=kmod)
    out2 = jax.block_until_ready(mod2(x))
    ref2 = ref_pool(x, 1, "max")
    assert out2.shape == (2, 4, 16, 16), out2.shape
    assert jnp.allclose(out2, ref2, atol=1e-5, rtol=1e-5), float(jnp.max(jnp.abs(out2 - ref2)))

    # Case 3: identity preprocess, avg pool, stride 1 (inv-count multiply path).
    mod3 = PoolingPallas(C_in=4, C_out=4, stride=1, mode="avg", key=kmod)
    out3 = jax.block_until_ready(mod3(x))
    ref3 = ref_pool(x, 1, "avg")
    assert out3.shape == (2, 4, 16, 16), out3.shape
    assert jnp.allclose(out3, ref3, atol=1e-5, rtol=1e-5), float(jnp.max(jnp.abs(out3 - ref3)))

    # Case 4: preprocess, max pool, stride 2 (plain selection path).
    mod4 = PoolingPallas(C_in=4, C_out=8, stride=2, mode="max", key=kmod)
    out4 = jax.block_until_ready(mod4(x))
    ref4 = ref_pool(ref_preprocess(x, *mod4.params), 2, "max")
    assert out4.shape == (2, 8, 8, 8), out4.shape
    assert jnp.allclose(out4, ref4, atol=1e-4, rtol=1e-4), float(jnp.max(jnp.abs(out4 - ref4)))

    print("KERNEL_OK")
</pallas_src>

<mosaic_0001>
module attributes {stable_mosaic.version = 11 : i64} {
  func.func @kernel(%arg0: i32, %arg1: memref<1x4x256xf32, #tpu.memory_space<vmem>>, %arg2: memref<8x4xf32, #tpu.memory_space<vmem>>, %arg3: memref<8x1xf32, #tpu.memory_space<vmem>>, %arg4: memref<8x1xf32, #tpu.memory_space<vmem>>, %arg5: memref<4x256xf32, #tpu.memory_space<vmem>>, %arg6: memref<256x64xf32, #tpu.memory_space<vmem>>, %arg7: memref<1x8x64xf32, #tpu.memory_space<vmem>>) attributes {dimension_semantics = [#tpu.dimension_semantics<parallel>], iteration_bounds = array<i64: 2>, scalar_prefetch = 0 : i64, scratch_operands = 0 : i64, tpu.core_type = #tpu.core_type<tc>, window_params = [{transform_indices = @transform_0, window_bounds = array<i64: 1, 4, 256>}, {pipeline_mode = #tpu.pipeline_mode<synchronous>, transform_indices = @transform_1, window_bounds = array<i64: 8, 4>}, {pipeline_mode = #tpu.pipeline_mode<synchronous>, transform_indices = @transform_2, window_bounds = array<i64: 8, 1>}, {pipeline_mode = #tpu.pipeline_mode<synchronous>, transform_indices = @transform_3, window_bounds = array<i64: 8, 1>}, {pipeline_mode = #tpu.pipeline_mode<synchronous>, transform_indices = @transform_4, window_bounds = array<i64: 4, 256>}, {pipeline_mode = #tpu.pipeline_mode<synchronous>, transform_indices = @transform_5, window_bounds = array<i64: 256, 64>}, {transform_indices = @transform_6, window_bounds = array<i64: 1, 8, 64>}]} {
    %c0 = arith.constant 0 : index
    %c0_0 = arith.constant 0 : index
    %c0_1 = arith.constant 0 : index
    %0 = vector.load %arg1[%c0, %c0_0, %c0_1] : memref<1x4x256xf32, #tpu.memory_space<vmem>>, vector<1x4x256xf32>
    %1 = vector.shape_cast %0 : vector<1x4x256xf32> to vector<4x256xf32>
    %cst = arith.constant 0.000000e+00 : f32
    %2 = vector.broadcast %cst : f32 to vector<4x256xf32>
    %3 = arith.maximumf %1, %2 : vector<4x256xf32>
    %c0_2 = arith.constant 0 : index
    %c0_3 = arith.constant 0 : index
    %4 = vector.load %arg2[%c0_2, %c0_3] : memref<8x4xf32, #tpu.memory_space<vmem>>, vector<8x4xf32>
    %cst_4 = arith.constant dense<0.000000e+00> : vector<8x256xf32>
    %5 = tpu.matmul %4, %3, %cst_4 {dimension_numbers = #tpu.dot_dimension_numbers<[1], [0], [0], [1], [0, 0, 1, 1], [], []>} : vector<8x4xf32>, vector<4x256xf32>, vector<8x256xf32> -> vector<8x256xf32>
    %c0_5 = arith.constant 0 : index
    %c0_6 = arith.constant 0 : index
    %6 = vector.load %arg3[%c0_5, %c0_6] : memref<8x1xf32, #tpu.memory_space<vmem>>, vector<8x1xf32>
    %7 = vector.broadcast %6 : vector<8x1xf32> to vector<8x256xf32>
    %8 = arith.mulf %5, %7 : vector<8x256xf32>
    %c0_7 = arith.constant 0 : index
    %c0_8 = arith.constant 0 : index
    %9 = vector.load %arg4[%c0_7, %c0_8] : memref<8x1xf32, #tpu.memory_space<vmem>>, vector<8x1xf32>
    %10 = vector.broadcast %9 : vector<8x1xf32> to vector<8x256xf32>
    %11 = arith.addf %8, %10 : vector<8x256xf32>
    %c0_9 = arith.constant 0 : index
    %c0_10 = arith.constant 0 : index
    %12 = vector.load %arg5[%c0_9, %c0_10] : memref<4x256xf32, #tpu.memory_space<vmem>>, vector<1x256xf32>
    %c1 = arith.constant 1 : index
    %c0_11 = arith.constant 0 : index
    %13 = vector.load %arg5[%c1, %c0_11] : memref<4x256xf32, #tpu.memory_space<vmem>>, vector<1x256xf32>
    %c2 = arith.constant 2 : index
    %c0_12 = arith.constant 0 : index
    %14 = vector.load %arg5[%c2, %c0_12] : memref<4x256xf32, #tpu.memory_space<vmem>>, vector<1x256xf32>
    %c3 = arith.constant 3 : index
    %c0_13 = arith.constant 0 : index
    %15 = vector.load %arg5[%c3, %c0_13] : memref<4x256xf32, #tpu.memory_space<vmem>>, vector<1x256xf32>
    %16 = vector.extract_strided_slice %11 {offsets = [0, 255], sizes = [8, 1], strides = [1, 1]} : vector<8x256xf32> to vector<8x1xf32>
    %17 = vector.extract_strided_slice %11 {offsets = [0, 0], sizes = [8, 255], strides = [1, 1]} : vector<8x256xf32> to vector<8x255xf32>
    %18 = tpu.concatenate %16, %17 in 1 : vector<8x1xf32>, vector<8x255xf32> -> vector<8x256xf32>
    %19 = vector.broadcast %12 : vector<1x256xf32> to vector<8x256xf32>
    %20 = arith.mulf %18, %19 : vector<8x256xf32>
    %21 = arith.addf %11, %20 : vector<8x256xf32>
    %22 = vector.extract_strided_slice %11 {offsets = [0, 1], sizes = [8, 255], strides = [1, 1]} : vector<8x256xf32> to vector<8x255xf32>
    %23 = vector.extract_strided_slice %11 {offsets = [0, 0], sizes = [8, 1], strides = [1, 1]} : vector<8x256xf32> to vector<8x1xf32>
    %24 = tpu.concatenate %22, %23 in 1 : vector<8x255xf32>, vector<8x1xf32> -> vector<8x256xf32>
    %25 = vector.broadcast %13 : vector<1x256xf32> to vector<8x256xf32>
    %26 = arith.mulf %24, %25 : vector<8x256xf32>
    %27 = arith.addf %21, %26 : vector<8x256xf32>
    %28 = vector.extract_strided_slice %27 {offsets = [0, 240], sizes = [8, 16], strides = [1, 1]} : vector<8x256xf32> to vector<8x16xf32>
    %29 = vector.extract_strided_slice %27 {offsets = [0, 0], sizes = [8, 240], strides = [1, 1]} : vector<8x256xf32> to vector<8x240xf32>
    %30 = tpu.concatenate %28, %29 in 1 : vector<8x16xf32>, vector<8x240xf32> -> vector<8x256xf32>
    %31 = vector.broadcast %14 : vector<1x256xf32> to vector<8x256xf32>
    %32 = arith.mulf %30, %31 : vector<8x256xf32>
    %33 = arith.addf %27, %32 : vector<8x256xf32>
    %34 = vector.extract_strided_slice %27 {offsets = [0, 16], sizes = [8, 240], strides = [1, 1]} : vector<8x256xf32> to vector<8x240xf32>
    %35 = vector.extract_strided_slice %27 {offsets = [0, 0], sizes = [8, 16], strides = [1, 1]} : vector<8x256xf32> to vector<8x16xf32>
    %36 = tpu.concatenate %34, %35 in 1 : vector<8x240xf32>, vector<8x16xf32> -> vector<8x256xf32>
    %37 = vector.broadcast %15 : vector<1x256xf32> to vector<8x256xf32>
    %38 = arith.mulf %36, %37 : vector<8x256xf32>
    %39 = arith.addf %33, %38 : vector<8x256xf32>
    %c0_14 = arith.constant 0 : index
    %c0_15 = arith.constant 0 : index
    %40 = vector.load %arg6[%c0_14, %c0_15] : memref<256x64xf32, #tpu.memory_space<vmem>>, vector<256x64xf32>
    %cst_16 = arith.constant dense<0.000000e+00> : vector<8x64xf32>
    %41 = tpu.matmul %39, %40, %cst_16 {dimension_numbers = #tpu.dot_dimension_numbers<[1], [0], [0], [1], [0, 0, 1, 1], [], []>} : vector<8x256xf32>, vector<256x64xf32>, vector<8x64xf32> -> vector<8x64xf32>
    %c0_17 = arith.constant 0 : index
    %c0_18 = arith.constant 0 : index
    %c0_19 = arith.constant 0 : index
    %42 = vector.load %arg7[%c0_17, %c0_18, %c0_19] : memref<1x8x64xf32, #tpu.memory_space<vmem>>, vector<1x8x64xf32>
    %43 = vector.shape_cast %42 : vector<1x8x64xf32> to vector<8x64xf32>
    %44 = vector.shape_cast %41 : vector<8x64xf32> to vector<1x8x64xf32>
    tpu.vector_store %arg7[%c0_17, %c0_18, %c0_19], %44 {strides = array<i32>} : memref<1x8x64xf32, #tpu.memory_space<vmem>>, vector<1x8x64xf32>,
    return
  }
  func.func @transform_0(%arg0: i32) -> (i32, i32, i32) {
    %c0_i32 = arith.constant 0 : i32
    %c0_i32_0 = arith.constant 0 : i32
    %c0_i32_1 = arith.constant 0 : i32
    return %arg0, %c0_i32, %c0_i32_0 : i32, i32, i32
  }
  func.func @transform_1(%arg0: i32) -> (i32, i32) {
    %c0_i32 = arith.constant 0 : i32
    %c0_i32_0 = arith.constant 0 : i32
    %c0_i32_1 = arith.constant 0 : i32
    return %c0_i32, %c0_i32_0 : i32, i32
  }
  func.func @transform_2(%arg0: i32) -> (i32, i32) {
    %c0_i32 = arith.constant 0 : i32
    %c0_i32_0 = arith.constant 0 : i32
    %c0_i32_1 = arith.constant 0 : i32
    return %c0_i32, %c0_i32_0 : i32, i32
  }
  func.func @transform_3(%arg0: i32) -> (i32, i32) {
    %c0_i32 = arith.constant 0 : i32
    %c0_i32_0 = arith.constant 0 : i32
    %c0_i32_1 = arith.constant 0 : i32
    return %c0_i32, %c0_i32_0 : i32, i32
  }
  func.func @transform_4(%arg0: i32) -> (i32, i32) {
    %c0_i32 = arith.constant 0 : i32
    %c0_i32_0 = arith.constant 0 : i32
    %c0_i32_1 = arith.constant 0 : i32
    return %c0_i32, %c0_i32_0 : i32, i32
  }
  func.func @transform_5(%arg0: i32) -> (i32, i32) {
    %c0_i32 = arith.constant 0 : i32
    %c0_i32_0 = arith.constant 0 : i32
    %c0_i32_1 = arith.constant 0 : i32
    return %c0_i32, %c0_i32_0 : i32, i32
  }
  func.func @transform_6(%arg0: i32) -> (i32, i32, i32) {
    %c0_i32 = arith.constant 0 : i32
    %c0_i32_0 = arith.constant 0 : i32
    %c0_i32_1 = arith.constant 0 : i32
    return %arg0, %c0_i32, %c0_i32_0 : i32, i32, i32
  }
}

</mosaic_0001>

<llo_original>
// kernel: tpu_custom_call.1
$region0: #{tpu_custom_call.1}
  #allocation0 [shape = 'u32[]', space=smem, size = 0x4, offset = 0x4, fixed_abs, tag = 'smem constant byte address 0x4 - core index']
  #allocation1 [shape = 'u32[144,128]{1,0:T(1,128)}', space=vmem, size = 0x12000, scoped, tag = 'internal scratch']
  %s0 = inlined_call_operand.vmem [shape: f32[2,4,256], index: 0, kind: input, shape index: {}]
  %s1 = inlined_call_operand.vmem [shape: f32[8,4], index: 1, kind: input, shape index: {}]
  %s2 = inlined_call_operand.vmem [shape: f32[8,1], index: 2, kind: input, shape index: {}]
  %s3 = inlined_call_operand.vmem [shape: f32[8,1], index: 3, kind: input, shape index: {}]
  %s4 = inlined_call_operand.vmem [shape: f32[4,256], index: 4, kind: input, shape index: {}]
  %s5 = inlined_call_operand.vmem [shape: f32[256,64], index: 5, kind: input, shape index: {}]
  %s6 = inlined_call_operand.hbm [shape: f32[2,8,64], index: 6, kind: output, shape index: {}]
  %s7 = sld [smem:[#allocation0]]
  $region57: #{tpu_custom_call.1} parent=0
    _
  %s9 = ssub.s32 1, %s7
  %s10 = scalar_select 0, %s9, %s7
  $region1: #{tpu_custom_call.1} parent=0
    #allocation2 [shape = 'u8[8192]{0}', space=vmem, size = 0x2000, scoped, tag = 'output window, operand 0']
    #allocation3 [shape = 's32[2]{0}', space=sflag, size = 0x8, scoped, tag = 'scoped memory for tpu_custom_call.1']
    %11 = vsyncpa [#allocation3], 0
    %s12 = scalar_lea.sflag [#allocation3], 1
    %13 = vsyncpa %s12, 0
    loop: start=0, step=1, limit=4
    $region2: #{tpu_custom_call.1} parent=1 // loop_pre_header
      _
    $region3: #{tpu_custom_call.1} parent=1 // loop_header
      %s15 = sphi 0, %s19
      %p16 = scmp.ge.s32.totalorder %s15, 4
      %s25 = sphi 0, %s27
      %s28 = sphi 0, %s25
      %s29 = sphi 0, %s28
      %s45 = sphi 0, %s29
      %s49 = sphi 0, %s49
      %s51 = sphi 0, %s49
      %s52 = sphi 0, %s51
      %s66 = sphi 0, %s52
      %s70 = sphi 0, %s70
      %s72 = sphi 0, %s70
      %s73 = sphi 0, %s72
      %s87 = sphi 0, %s73
      %s91 = sphi 0, %s91
      %s93 = sphi 0, %s91
      %s94 = sphi 0, %s93
      %s108 = sphi 0, %s94
      %s112 = sphi 0, %s112
      %s114 = sphi 0, %s112
      %s115 = sphi 0, %s114
      %s129 = sphi 0, %s115
      %s133 = sphi 0, %s133
      %s135 = sphi 0, %s133
      %s136 = sphi 0, %s135
      %s150 = sphi 0, %s136
      %s156 = sphi 0, %s158
      %s159 = sphi 0, %s156
      %s160 = sphi 0, %s159
      %s176 = sphi 0, %s160
    $region4: #{tpu_custom_call.1} parent=1 // loop_header_branch
      %18 = sbr.rel (%p16) target = $region8
    $region5: #{tpu_custom_call.1} parent=1 // loop_body
      %s20 = ssub.s32 %s15, 1
      %s21 = ssub.s32 %s15, 2
      %s22 = sadd.s32 %s15, 1
      %s23 = ssub.s32 %s15, %s22
      %p24 = scmp.eq.s32.totalorder %s23, 0
      %s26 = sadd.s32 %s25, 1
      %s27 = scalar_select %p24, %s25, %s26
      %p30 = pneg %p24
      %p31 = scmp.eq.s32.totalorder %s15, 1
      %p32 = por %p30, %p31
      %p33 = scmp.ne.s32.totalorder %s25, %s28
      %p34 = scmp.eq.s32.totalorder %s15, 0
      %p35 = por %p33, %p34
      %p36 = scmp.ne.s32.totalorder %s25, %s28
      %p37 = scmp.eq.s32.totalorder %s20, 1
      %p38 = por %p36, %p37
      %p39 = scmp.ne.s32.totalorder %s28, %s29
      %p40 = scmp.eq.s32.totalorder %s20, 0
      %p41 = por %p39, %p40
      %p42 = scmp.ne.s32.totalorder %s28, %s29
      %p43 = scmp.eq.s32.totalorder %s21, 1
      %p44 = por %p42, %p43
      %p46 = scmp.ne.s32.totalorder %s29, %s45
      %p47 = scmp.eq.s32.totalorder %s21, 0
      %p48 = por %p46, %p47
      %s50 = sadd.s32 %s49, 1
      %p53 = scmp.eq.s32.totalorder %s15, 1
      %p54 = scmp.ne.s32.totalorder %s49, %s51
      %p55 = scmp.eq.s32.totalorder %s15, 0
      %p56 = por %p54, %p55
      %p57 = scmp.ne.s32.totalorder %s49, %s51
      %p58 = scmp.eq.s32.totalorder %s20, 1
      %p59 = por %p57, %p58
      %p60 = scmp.ne.s32.totalorder %s51, %s52
      %p61 = scmp.eq.s32.totalorder %s20, 0
      %p62 = por %p60, %p61
      %p63 = scmp.ne.s32.totalorder %s51, %s52
      %p64 = scmp.eq.s32.totalorder %s21, 1
      %p65 = por %p63, %p64
      %p67 = scmp.ne.s32.totalorder %s52, %s66
      %p68 = scmp.eq.s32.totalorder %s21, 0
      %p69 = por %p67, %p68
      %s71 = sadd.s32 %s70, 1
      %p74 = scmp.eq.s32.totalorder %s15, 1
      %p75 = scmp.ne.s32.totalorder %s70, %s72
      %p76 = scmp.eq.s32.totalorder %s15, 0
      %p77 = por %p75, %p76
      %p78 = scmp.ne.s32.totalorder %s70, %s72
      %p79 = scmp.eq.s32.totalorder %s20, 1
      %p80 = por %p78, %p79
      %p81 = scmp.ne.s32.totalorder %s72, %s73
      %p82 = scmp.eq.s32.totalorder %s20, 0
      %p83 = por %p81, %p82
      %p84 = scmp.ne.s32.totalorder %s72, %s73
      %p85 = scmp.eq.s32.totalorder %s21, 1
      %p86 = por %p84, %p85
      %p88 = scmp.ne.s32.totalorder %s73, %s87
      %p89 = scmp.eq.s32.totalorder %s21, 0
      %p90 = por %p88, %p89
      %s92 = sadd.s32 %s91, 1
      %p95 = scmp.eq.s32.totalorder %s15, 1
      %p96 = scmp.ne.s32.totalorder %s91, %s93
      %p97 = scmp.eq.s32.totalorder %s15, 0
      %p98 = por %p96, %p97
      %p99 = scmp.ne.s32.totalorder %s91, %s93
      %p100 = scmp.eq.s32.totalorder %s20, 1
      %p101 = por %p99, %p100
      %p102 = scmp.ne.s32.totalorder %s93, %s94
      %p103 = scmp.eq.s32.totalorder %s20, 0
      %p104 = por %p102, %p103
      %p105 = scmp.ne.s32.totalorder %s93, %s94
      %p106 = scmp.eq.s32.totalorder %s21, 1
      %p107 = por %p105, %p106
      %p109 = scmp.ne.s32.totalorder %s94, %s108
      %p110 = scmp.eq.s32.totalorder %s21, 0
      %p111 = por %p109, %p110
      %s113 = sadd.s32 %s112, 1
      %p116 = scmp.eq.s32.totalorder %s15, 1
      %p117 = scmp.ne.s32.totalorder %s112, %s114
      %p118 = scmp.eq.s32.totalorder %s15, 0
      %p119 = por %p117, %p118
      %p120 = scmp.ne.s32.totalorder %s112, %s114
      %p121 = scmp.eq.s32.totalorder %s20, 1
      %p122 = por %p120, %p121
      %p123 = scmp.ne.s32.totalorder %s114, %s115
      %p124 = scmp.eq.s32.totalorder %s20, 0
      %p125 = por %p123, %p124
      %p126 = scmp.ne.s32.totalorder %s114, %s115
      %p127 = scmp.eq.s32.totalorder %s21, 1
      %p128 = por %p126, %p127
      %p130 = scmp.ne.s32.totalorder %s115, %s129
      %p131 = scmp.eq.s32.totalorder %s21, 0
      %p132 = por %p130, %p131
      %s134 = sadd.s32 %s133, 1
      %p137 = scmp.eq.s32.totalorder %s15, 1
      %p138 = scmp.ne.s32.totalorder %s133, %s135
      %p139 = scmp.eq.s32.totalorder %s15, 0
      %p140 = por %p138, %p139
      %p141 = scmp.ne.s32.totalorder %s133, %s135
      %p142 = scmp.eq.s32.totalorder %s20, 1
      %p143 = por %p141, %p142
      %p144 = scmp.ne.s32.totalorder %s135, %s136
      %p145 = scmp.eq.s32.totalorder %s20, 0
      %p146 = por %p144, %p145
      %p147 = scmp.ne.s32.totalorder %s135, %s136
      %p148 = scmp.eq.s32.totalorder %s21, 1
      %p149 = por %p147, %p148
      %p151 = scmp.ne.s32.totalorder %s136, %s150
      %p152 = scmp.eq.s32.totalorder %s21, 0
      %p153 = por %p151, %p152
      %s154 = ssub.s32 %s15, %s22
      %p155 = scmp.eq.s32.totalorder %s154, 0
      %s157 = sadd.s32 %s156, 1
      %s158 = scalar_select %p155, %s156, %s157
      %p161 = pneg %p155
      %p162 = scmp.eq.s32.totalorder %s15, 1
      %p163 = por %p161, %p162
      %p164 = scmp.ne.s32.totalorder %s156, %s159
      %p165 = scmp.eq.s32.totalorder %s15, 0
      %p166 = por %p164, %p165
      %p167 = scmp.ne.s32.totalorder %s156, %s159
      %p168 = scmp.eq.s32.totalorder %s20, 1
      %p169 = por %p167, %p168
      %p170 = scmp.ne.s32.totalorder %s159, %s160
      %p171 = scmp.eq.s32.totalorder %s20, 0
      %p172 = por %p170, %p171
      %p173 = scmp.ne.s32.totalorder %s159, %s160
      %p174 = scmp.eq.s32.totalorder %s21, 1
      %p175 = por %p173, %p174
      %p177 = scmp.ne.s32.totalorder %s160, %s176
      %p178 = scmp.eq.s32.totalorder %s21, 0
      %p179 = por %p177, %p178
      %p180 = scmp.le.s32.totalorder 1, %s15
      %p181 = scmp.lt.s32.totalorder %s15, 3
      %p182 = pnand %p180, %p181
      %p183 = pneg %p182
      // Predicated region
      $region9: #{tpu_custom_call.1} parent=5 // pred_check
        _
      $region10: #{tpu_custom_call.1} parent=5 // pred_check_branch
        %185 = sbr.rel (%p182) target = $region12
      $region11: #{tpu_custom_call.1} parent=5 // pred_region
        %s186 = ssub.s32 %s15, 1
        // Predicated region
        $region13: #{tpu_custom_call.1} parent=11 // pred_check
          %p187 = pneg %p62
        $region14: #{tpu_custom_call.1} parent=11 // pred_check_branch
          %189 = sbr.rel (%p187) target = $region16
        $region15: #{tpu_custom_call.1} parent=11 // pred_region
          _
        $region16: #{tpu_custom_call.1} parent=11 // pred_fallthru
          _
        // Predicated region
        $region17: #{tpu_custom_call.1} parent=11 // pred_check
          %p190 = pneg %p83
        $region18: #{tpu_custom_call.1} parent=11 // pred_check_branch
          %192 = sbr.rel (%p190) target = $region20
        $region19: #{tpu_custom_call.1} parent=11 // pred_region
          _
        $region20: #{tpu_custom_call.1} parent=11 // pred_fallthru
          _
        // Predicated region
        $region21: #{tpu_custom_call.1} parent=11 // pred_check
          %p193 = pneg %p104
        $region22: #{tpu_custom_call.1} parent=11 // pred_check_branch
          %195 = sbr.rel (%p193) target = $region24
        $region23: #{tpu_custom_call.1} parent=11 // pred_region
          _
        $region24: #{tpu_custom_call.1} parent=11 // pred_fallthru
          _
        // Predicated region
        $region25: #{tpu_custom_call.1} parent=11 // pred_check
          %p196 = pneg %p125
        $region26: #{tpu_custom_call.1} parent=11 // pred_check_branch
          %198 = sbr.rel (%p196) target = $region28
        $region27: #{tpu_custom_call.1} parent=11 // pred_region
          _
        $region28: #{tpu_custom_call.1} parent=11 // pred_fallthru
          _
        // Predicated region
        $region29: #{tpu_custom_call.1} parent=11 // pred_check
          %p199 = pneg %p146
        $region30: #{tpu_custom_call.1} parent=11 // pred_check_branch
          %201 = sbr.rel (%p199) target = $region32
        $region31: #{tpu_custom_call.1} parent=11 // pred_region
          _
        $region32: #{tpu_custom_call.1} parent=11 // pred_fallthru
          _
      $region12: #{tpu_custom_call.1} parent=5 // pred_fallthru
        _
      %p202 = scmp.lt.s32.totalorder %s15, 2
      // Predicated region
      $region33: #{tpu_custom_call.1} parent=5 // pred_check
        %p203 = pneg %p202
      $region34: #{tpu_custom_call.1} parent=5 // pred_check_branch
        %205 = sbr.rel (%p203) target = $region36
      $region35: #{tpu_custom_call.1} parent=5 // pred_region
        // Predicated region
        $region37: #{tpu_custom_call.1} parent=35 // pred_check
          %p206 = pneg %p35
        $region38: #{tpu_custom_call.1} parent=35 // pred_check_branch
          %208 = sbr.rel (%p206) target = $region40
        $region39: #{tpu_custom_call.1} parent=35 // pred_region
          %p209 = scmp.lt.s32.totalorder %s15, 1
          %s210 = scalar_select %p209, %s15, 1
          %s211 = smul.addr %s210, 2
          %s212 = smul.addr %s211, 4
          %s213 = scalar_lea.vmem %s0, %s212
        $region40: #{tpu_custom_call.1} parent=35 // pred_fallthru
          _
      $region36: #{tpu_custom_call.1} parent=5 // pred_fallthru
        _
      %p214 = scmp.le.s32.totalorder 1, %s15
      %p215 = scmp.lt.s32.totalorder %s15, 3
      %p216 = pnand %p214, %p215
      %p217 = pneg %p216
      // Predicated region
      $region41: #{tpu_custom_call.1} parent=5 // pred_check
        _
      $region42: #{tpu_custom_call.1} parent=5 // pred_check_branch
        %219 = sbr.rel (%p216) target = $region44
      $region43: #{tpu_custom_call.1} parent=5 // pred_region
        %s220 = ssub.s32 %s15, 1
        %p221 = scmp.lt.s32.totalorder %s20, 1
        %s222 = scalar_select %p221, %s20, 1
        %s223 = smul.addr %s222, 2
        %s224 = smul.addr %s223, 4
        %s225 = scalar_lea.vmem %s0, %s224
        %p226 = pneg %p41
        %p227 = pneg %p38
        %p228 = pneg %p62
        %p229 = pneg %p59
        %p230 = pneg %p83
        %p231 = pneg %p80
        %p232 = pneg %p104
        %p233 = pneg %p101
        %p234 = pneg %p125
        %p235 = pneg %p122
        %p236 = pneg %p146
        %p237 = pneg %p143
        %p238 = pneg %p172
        %p239 = pneg %p169
        %s240 = sand.u32 %s159, 1
        %s241 = scalar_lea.sflag [#allocation3], %s240
        %s242 = sand.u32 %s159, 1
        %s243 = smul.addr %s242, 8
        %s244 = scalar_lea.vmem [#allocation2], %s243
        %p245 = scmp.lt.s32.totalorder %s20, 1
        %s246 = scalar_select %p245, %s20, 1
        %s247 = smul.addr %s246, 2
        %s248 = smul.addr %s247, 4
        %s249 = scalar_lea.vmem %s0, %s248
        %v250 = vld [vmem:[%s249] sm:$0xff]
        %v251 = vmax.f32 %v250, 0.0
        %v252 = vld [vmem:[%s1] sm:$0xff]
        %v254 = vcombine.high %v251, %v251
        %vm255 = vcmask 31744
        %v257 = vsel %vm255, %v252, 0
        %vm259 = vcmask 1043456
        %v260 = vsel %vm259, %v251, 0
        %v262 = vsel %vm259, %v254, 0
        %264 = vmatprep.subr.mxu0 0.0
        %265 = vmatpush1.msra.mxu0 0.0
        %266 = vmatprep.subr.mxu0 0.0
        %267 = vmatpush1.msra.mxu0 0.0
        %268 = vmatprep.subr.mxu0 0.0
        %269 = vmatpush1.msra.mxu0 0.0
        %270 = vmatprep.subr.mxu0 0.0
        %271 = vmatpush1.msra.mxu0 0.0
        %272 = vmatprep.subr.mxu0 0.0
        %273 = vmatpush1.msra.mxu0 0.0
        %274 = vmatprep.subr.mxu0 0.0
        %275 = vmatpush1.msra.mxu0 0.0
        %276 = vmatprep.subr.mxu0 0.0
        %277 = vmatpush1.msra.mxu0 0.0
        %278 = vmatprep.subr.mxu0 0.0
        %279 = vmatpush1.msra.mxu0 0.0
        %280 = vmatprep.subr.mxu0 0.0
        %281 = vmatpush1.msra.mxu0 0.0
        %282 = vmatprep.subr.mxu0 0.0
        %283 = vmatpush1.msra.mxu0 0.0
        %284 = vmatprep.subr.mxu0 0.0
        %285 = vmatpush1.msra.mxu0 0.0
        %286 = vmatprep.subr.mxu0 0.0
        %287 = vmatpush1.msra.mxu0 0.0
        %288 = vmatprep.subr.mxu0 0.0
        %289 = vmatpush1.msra.mxu0 0.0
        %290 = vmatprep.subr.mxu0 0.0
        %291 = vmatpush1.msra.mxu0 0.0
        %292 = vmatprep.subr.mxu0 0.0
        %293 = vmatpush1.msra.mxu0 0.0
        %294 = vmatprep.subr.mxu0 %v262
        %295 = vmatpush1.msra.mxu0 %v260
        %296 = vmatprep.subr.mxu0 0.0
        %297 = vmatpush2.msra.mxu0 0.0
        %298 = vmatprep.subr.mxu0 0.0
        %299 = vmatpush2.msra.mxu0 0.0
        %300 = vmatprep.subr.mxu0 0.0
        %301 = vmatpush2.msra.mxu0 0.0
        %302 = vmatprep.subr.mxu0 0.0
        %303 = vmatpush2.msra.mxu0 0.0
        %304 = vmatprep.subr.mxu0 0.0
        %305 = vmatpush2.msra.mxu0 0.0
        %306 = vmatprep.subr.mxu0 0.0
        %307 = vmatpush2.msra.mxu0 0.0
        %308 = vmatprep.subr.mxu0 0.0
        %309 = vmatpush2.msra.mxu0 0.0
        %310 = vmatprep.subr.mxu0 0.0
        %311 = vmatpush2.msra.mxu0 0.0
        %312 = vmatprep.subr.mxu0 0.0
        %313 = vmatpush2.msra.mxu0 0.0
        %314 = vmatprep.subr.mxu0 0.0
        %315 = vmatpush2.msra.mxu0 0.0
        %316 = vmatprep.subr.mxu0 0.0
        %317 = vmatpush2.msra.mxu0 0.0
        %318 = vmatprep.subr.mxu0 0.0
        %319 = vmatpush2.msra.mxu0 0.0
        %320 = vmatprep.subr.mxu0 0.0
        %321 = vmatpush2.msra.mxu0 0.0
        %322 = vmatprep.subr.mxu0 0.0
        %323 = vmatpush2.msra.mxu0 0.0
        %324 = vmatprep.subr.mxu0 0.0
        %325 = vmatpush2.msra.mxu0 0.0
        %326 = vmatprep.subr.mxu0 0.0
        %327 = vmatpush2.msra.mxu0 0.0
        %328 = vmatprep.mubr.f32.mxu0 0.0
        %329 = vmatmul.mubr.f32.gmra.mxu0 %v257
        %v330 = vpop.f32.mrf.mxu0
        %v331 = vadd.f32 0.0, %v330
        %v332 = vpop.f32.mrf.mxu0
        %v333 = vadd.f32 0.0, %v332
        %334 = vdwg.mxu0
        %v335 = vld [vmem:[%s2] sm:$0xff]
        %337 = vset.pattern.permute.xlu0 0
        %338 = vperm.xlu0 %337, %v335
        %v339 = vpop.permute.xlu0 %338
        %v341 = vmul.f32 %v331, %v339
        %v342 = vmul.f32 %v333, %v339
        %v343 = vld [vmem:[%s3] sm:$0xff]
        %345 = vset.pattern.permute.xlu0 0
        %346 = vperm.xlu0 %345, %v343
        %v347 = vpop.permute.xlu0 %346
        %v349 = vadd.f32 %v341, %v347
        %v350 = vadd.f32 %v342, %v347
        %v351 = vld [vmem:[%s4] ss:$4 sm:$0x3]
        %s352 = scalar_lea.vmem %s4, 1
        %v353 = vld [vmem:[%s352] ss:$4 sm:$0x3]
        %s354 = scalar_lea.vmem %s4, 2
        %v355 = vld [vmem:[%s354] ss:$4 sm:$0x3]
        %s356 = scalar_lea.vmem %s4, 3
        %v357 = vld [vmem:[%s356] ss:$4 sm:$0x3]
        %359 = vrot.lane.b32.xlu0 %v350, 1
        %v360 = vpop.permute.xlu0 %359
        %363 = vrot.lane.b32.xlu0 %v349, 1
        %v364 = vpop.permute.xlu0 %363
        %vm365 = vcmask 7168
        %v366 = vsel %vm365, %v364, %v360
        %v369 = vsel %vm365, %v360, %v364
        %v371 = vlaneseq
        %v372 = vshrl.u32 %v371, 7
        %v373 = vsub.s32 0, %v372
        %v374 = vrot.slane %v351, %v373
        %v375 = vlaneseq
        %v376 = vshrl.u32 %v375, 7
        %v377 = vsub.s32 1, %v376
        %v378 = vrot.slane %v351, %v377
        %v381 = vmul.f32 %v369, %v374
        %v382 = vmul.f32 %v366, %v378
        %v383 = vadd.f32 %v349, %v381
        %v384 = vadd.f32 %v350, %v382
        %385 = vrot.lane.b32.xlu0 %v349, 127
        %v386 = vpop.permute.xlu0 %385
        %387 = vrot.lane.b32.xlu0 %v350, 127
        %v388 = vpop.permute.xlu0 %387
        %vm389 = vcmask 1039360
        %v390 = vsel %vm389, %v386, %v388
        %v394 = vsel %vm389, %v388, %v386
        %v396 = vlaneseq
        %v397 = vshrl.u32 %v396, 7
        %v398 = vsub.s32 0, %v397
        %v399 = vrot.slane %v353, %v398
        %v400 = vlaneseq
        %v401 = vshrl.u32 %v400, 7
        %v402 = vsub.s32 1, %v401
        %v403 = vrot.slane %v353, %v402
        %v406 = vmul.f32 %v390, %v399
        %v407 = vmul.f32 %v394, %v403
        %v408 = vadd.f32 %v383, %v406
        %v409 = vadd.f32 %v384, %v407
        %411 = vrot.lane.b32.xlu0 %v409, 16
        %v412 = vpop.permute.xlu0 %411
        %415 = vrot.lane.b32.xlu0 %v408, 16
        %v416 = vpop.permute.xlu0 %415
        %vm417 = vcmask 130048
        %v418 = vsel %vm417, %v416, %v412
        %v421 = vsel %vm417, %v412, %v416
        %v423 = vlaneseq
        %v424 = vshrl.u32 %v423, 7
        %v425 = vsub.s32 0, %v424
        %v426 = vrot.slane %v355, %v425
        %v427 = vlaneseq
        %v428 = vshrl.u32 %v427, 7
        %v429 = vsub.s32 1, %v428
        %v430 = vrot.slane %v355, %v429
        %v433 = vmul.f32 %v421, %v426
        %v434 = vmul.f32 %v418, %v430
        %v435 = vadd.f32 %v408, %v433
        %v436 = vadd.f32 %v409, %v434
        %437 = vrot.lane.b32.xlu0 %v408, 112
        %v438 = vpop.permute.xlu0 %437
        %439 = vrot.lane.b32.xlu0 %v409, 112
        %v440 = vpop.permute.xlu0 %439
        %vm441 = vcmask 916480
        %v442 = vsel %vm441, %v438, %v440
        %v446 = vsel %vm441, %v440, %v438
        %v448 = vlaneseq
        %v449 = vshrl.u32 %v448, 7
        %v450 = vsub.s32 0, %v449
        %v451 = vrot.slane %v357, %v450
        %v452 = vlaneseq
        %v453 = vshrl.u32 %v452, 7
        %v454 = vsub.s32 1, %v453
        %v455 = vrot.slane %v357, %v454
        %v458 = vmul.f32 %v442, %v451
        %v459 = vmul.f32 %v446, %v455
        %v460 = vadd.f32 %v435, %v458
        %v461 = vadd.f32 %v436, %v459
        %v462 = vld [vmem:[%s5] sm:$0xff]
        %v463 = vld [vmem:[%s5 + $0x8] sm:$0xff]
        %v464 = vld [vmem:[%s5 + $0x10] sm:$0xff]
        %v465 = vld [vmem:[%s5 + $0x18] sm:$0xff]
        %v466 = vld [vmem:[%s5 + $0x20] sm:$0xff]
        %v467 = vld [vmem:[%s5 + $0x28] sm:$0xff]
        %v468 = vld [vmem:[%s5 + $0x30] sm:$0xff]
        %v469 = vld [vmem:[%s5 + $0x38] sm:$0xff]
        %v470 = vld [vmem:[%s5 + $0x40] sm:$0xff]
        %v471 = vld [vmem:[%s5 + $0x48] sm:$0xff]
        %v472 = vld [vmem:[%s5 + $0x50] sm:$0xff]
        %v473 = vld [vmem:[%s5 + $0x58] sm:$0xff]
        %v474 = vld [vmem:[%s5 + $0x60] sm:$0xff]
        %v475 = vld [vmem:[%s5 + $0x68] sm:$0xff]
        %v476 = vld [vmem:[%s5 + $0x70] sm:$0xff]
        %v477 = vld [vmem:[%s5 + $0x78] sm:$0xff]
        %v478 = vld [vmem:[%s5 + $0x80] sm:$0xff]
        %v479 = vld [vmem:[%s5 + $0x88] sm:$0xff]
        %v480 = vld [vmem:[%s5 + $0x90] sm:$0xff]
        %v481 = vld [vmem:[%s5 + $0x98] sm:$0xff]
        %v482 = vld [vmem:[%s5 + $0xa0] sm:$0xff]
        %v483 = vld [vmem:[%s5 + $0xa8] sm:$0xff]
        %v484 = vld [vmem:[%s5 + $0xb0] sm:$0xff]
        %v485 = vld [vmem:[%s5 + $0xb8] sm:$0xff]
        %v486 = vld [vmem:[%s5 + $0xc0] sm:$0xff]
        %v487 = vld [vmem:[%s5 + $0xc8] sm:$0xff]
        %v488 = vld [vmem:[%s5 + $0xd0] sm:$0xff]
        %v489 = vld [vmem:[%s5 + $0xd8] sm:$0xff]
        %v490 = vld [vmem:[%s5 + $0xe0] sm:$0xff]
        %v491 = vld [vmem:[%s5 + $0xe8] sm:$0xff]
        %v492 = vld [vmem:[%s5 + $0xf0] sm:$0xff]
        %v493 = vld [vmem:[%s5 + $0xf8] sm:$0xff]
        %494 = vmatprep.subr.mxu0 0.0
        %495 = vmatpush1.msra.mxu0 %v477
        %496 = vmatprep.subr.mxu0 0.0
        %497 = vmatpush1.msra.mxu0 %v476
        %498 = vmatprep.subr.mxu0 0.0
        %499 = vmatpush1.msra.mxu0 %v475
        %500 = vmatprep.subr.mxu0 0.0
        %501 = vmatpush1.msra.mxu0 %v474
        %502 = vmatprep.subr.mxu0 0.0
        %503 = vmatpush1.msra.mxu0 %v473
        %504 = vmatprep.subr.mxu0 0.0
        %505 = vmatpush1.msra.mxu0 %v472
        %506 = vmatprep.subr.mxu0 0.0
        %507 = vmatpush1.msra.mxu0 %v471
        %508 = vmatprep.subr.mxu0 0.0
        %509 = vmatpush1.msra.mxu0 %v470
        %510 = vmatprep.subr.mxu0 0.0
        %511 = vmatpush1.msra.mxu0 %v469
        %512 = vmatprep.subr.mxu0 0.0
        %513 = vmatpush1.msra.mxu0 %v468
        %514 = vmatprep.subr.mxu0 0.0
        %515 = vmatpush1.msra.mxu0 %v467
        %516 = vmatprep.subr.mxu0 0.0
        %517 = vmatpush1.msra.mxu0 %v466
        %518 = vmatprep.subr.mxu0 0.0
        %519 = vmatpush1.msra.mxu0 %v465
        %520 = vmatprep.subr.mxu0 0.0
        %521 = vmatpush1.msra.mxu0 %v464
        %522 = vmatprep.subr.mxu0 0.0
        %523 = vmatpush1.msra.mxu0 %v463
        %524 = vmatprep.subr.mxu0 0.0
        %525 = vmatpush1.msra.mxu0 %v462
        %526 = vmatprep.subr.mxu0 0.0
        %527 = vmatpush2.msra.mxu0 %v493
        %528 = vmatprep.subr.mxu0 0.0
        %529 = vmatpush2.msra.mxu0 %v492
        %530 = vmatprep.subr.mxu0 0.0
        %531 = vmatpush2.msra.mxu0 %v491
        %532 = vmatprep.subr.mxu0 0.0
        %533 = vmatpush2.msra.mxu0 %v490
        %534 = vmatprep.subr.mxu0 0.0
        %535 = vmatpush2.msra.mxu0 %v489
        %536 = vmatprep.subr.mxu0 0.0
        %537 = vmatpush2.msra.mxu0 %v488
        %538 = vmatprep.subr.mxu0 0.0
        %539 = vmatpush2.msra.mxu0 %v487
        %540 = vmatprep.subr.mxu0 0.0
        %541 = vmatpush2.msra.mxu0 %v486
        %542 = vmatprep.subr.mxu0 0.0
        %543 = vmatpush2.msra.mxu0 %v485
        %544 = vmatprep.subr.mxu0 0.0
        %545 = vmatpush2.msra.mxu0 %v484
        %546 = vmatprep.subr.mxu0 0.0
        %547 = vmatpush2.msra.mxu0 %v483
        %548 = vmatprep.subr.mxu0 0.0
        %549 = vmatpush2.msra.mxu0 %v482
        %550 = vmatprep.subr.mxu0 0.0
        %551 = vmatpush2.msra.mxu0 %v481
        %552 = vmatprep.subr.mxu0 0.0
        %553 = vmatpush2.msra.mxu0 %v480
        %554 = vmatprep.subr.mxu0 0.0
        %555 = vmatpush2.msra.mxu0 %v479
        %556 = vmatprep.subr.mxu0 0.0
        %557 = vmatpush2.msra.mxu0 %v478
        %558 = vmatprep.mubr.f32.mxu0 %v461
        %559 = vmatmul.mubr.f32.gmra.mxu0 %v460
        %v560 = vpop.f32.mrf.mxu0
        %v561 = vadd.f32 0.0, %v560
        %v562 = vpop.f32.mrf.mxu0
        %563 = vdwg.mxu0
        %vm564 = vcmask 523264
        %565 = vst.msk [vmem:[%s244] sm:$0xff] %vm564, %v561
        %s566 = sand.u32 %s159, 1
        %s567 = scalar_lea.sflag [#allocation3], %s566
        %s568 = sand.u32 %s159, 1
        %s569 = smul.addr %s568, 8
        %s570 = scalar_lea.vmem [#allocation2], %s569
        // Predicated region
        $region45: #{tpu_custom_call.1} parent=43 // pred_check
          %p571 = pneg %p169
        $region46: #{tpu_custom_call.1} parent=43 // pred_check_branch
          %573 = sbr.rel (%p571) target = $region48
        $region47: #{tpu_custom_call.1} parent=43 // pred_region
          %s575 = ssub.s32 128, 128
          %576 = vsyncadd %s567, %s575
          %s577 = smul.addr %s20, 128
          %s578 = scalar_lea.hbm %s6, %s577
          %s580 = sshll.u32 %s570, 4
          %s581 = int_to_ptr.vmem [resolvable:$true] %s580
          %583 = dma.vmem_to_hbm [thread:$0]  %s581, 128, %s578, %s567
        $region48: #{tpu_custom_call.1} parent=43 // pred_fallthru
          _
      $region44: #{tpu_custom_call.1} parent=5 // pred_fallthru
        _
      %p584 = scmp.le.s32.totalorder 2, %s15
      // Predicated region
      $region49: #{tpu_custom_call.1} parent=5 // pred_check
        %p585 = pneg %p584
      $region50: #{tpu_custom_call.1} parent=5 // pred_check_branch
        %587 = sbr.rel (%p585) target = $region52
      $region51: #{tpu_custom_call.1} parent=5 // pred_region
        %s588 = ssub.s32 %s15, 2
        // Predicated region
        $region53: #{tpu_custom_call.1} parent=51 // pred_check
          %p589 = pneg %p175
        $region54: #{tpu_custom_call.1} parent=51 // pred_check_branch
          %591 = sbr.rel (%p589) target = $region56
        $region55: #{tpu_custom_call.1} parent=51 // pred_region
          %s592 = sand.u32 %s160, 1
          %s593 = scalar_lea.sflag [#allocation3], %s592
          %s594 = sand.u32 %s160, 1
          %s595 = smul.addr %s594, 8
          %s596 = scalar_lea.vmem [#allocation2], %s595
          %597 = dma.done %s593, 128
        $region56: #{tpu_custom_call.1} parent=51 // pred_fallthru
          _
      $region52: #{tpu_custom_call.1} parent=5 // pred_fallthru
        _
    $region6: #{tpu_custom_call.1} parent=1 // loop_footer
      %s19 = sadd.s32 1, %s15
    $region7: #{tpu_custom_call.1} parent=1 // loop_footer_branch
      %14 = sbr.rel target = $region3
    $region8: #{tpu_custom_call.1} parent=1 // loop_exit
      _
    %598 = vsyncpa [#allocation3], 1
    %s599 = scalar_lea.sflag [#allocation3], 1
    %600 = vsyncpa %s599, 1

</llo_original>
